<compile_context>
chip_gen: v5e
topology: v5e:2x2
jax: 0.10.0
libtpu: 0.0.40
codegen_flags: <defaults>
</compile_context>

<pallas_src>
import functools
from queue import Queue

import jax
import jax.numpy as jnp
from jax.experimental import pallas as pl
from jax.experimental.pallas import tpu as pltpu


# ----------------------------------------------------------------------------
# Tiling helper
# ----------------------------------------------------------------------------
def _pick_tile(total, cap):
    """Largest tile <= cap that divides `total` and is a multiple of 128,
    falling back to the full extent (both satisfy the TPU lane constraint)."""
    if total <= cap:
        return total
    t = (cap // 128) * 128
    while t >= 128:
        if total % t == 0:
            return t
        t -= 128
    return total


# ----------------------------------------------------------------------------
# Pallas kernels
# ----------------------------------------------------------------------------
def _conv1x1_kernel(x_ref, w_ref, b_ref, o_ref, *, relu):
    # x_ref: (Cin, TM)   lane-dense activations (M = pixels is the minor dim)
    # w_ref: (Cout, Cin) tiny weight
    # b_ref: (Cout, 1)
    # o_ref: (Cout, TM)  lane-dense output (unmasked full-lane stores)
    x = x_ref[...].astype(jnp.float32)
    w = w_ref[...].astype(jnp.float32)
    b = b_ref[...].astype(jnp.float32)
    cout, cin = w.shape
    tm = x.shape[-1]

    if cin <= 16 and cout <= 16:
        # K=cin is <4% of the MXU width: do the channel mix on the VPU as
        # broadcast multiply-adds (exact f32, no MXU latency / layout penalty).
        acc = jnp.zeros((cout, tm), jnp.float32)
        for c in range(cin):
            acc = acc + w[:, c:c + 1] * x[c:c + 1, :]
        acc = acc + b
    else:
        # Larger channel counts: use the MXU.
        acc = jnp.dot(w, x, preferred_element_type=jnp.float32) + b

    if relu:
        acc = jnp.maximum(acc, 0.0)
    o_ref[...] = acc.astype(o_ref.dtype)


def _add_kernel(a_ref, b_ref, o_ref):
    o_ref[...] = a_ref[...] + b_ref[...]


def conv1x1_nchw(x_nchw, w_oc_ic, b, *, relu=False, tile_m=2048):
    """1x1 conv (+ optional ReLU) on an NCHW tensor.

    Computed NCHW-natively as (Cout, Cin) @ (Cin, M) per batch element, with a
    grid over (N, M-tiles) so the output stays lane-dense and the pipeline
    double-buffers DMA against compute.
    """
    N, C, H, W = x_nchw.shape
    Cout, Cin = w_oc_ic.shape
    assert Cin == C
    M = H * W
    TM = _pick_tile(M, tile_m)
    grid = (N, M // TM)

    x3 = x_nchw.reshape(N, C, M)          # contiguous, free reshape
    b2 = b.reshape(Cout, 1)

    out3 = pl.pallas_call(
        functools.partial(_conv1x1_kernel, relu=relu),
        out_shape=jax.ShapeDtypeStruct((N, Cout, M), x_nchw.dtype),
        grid=grid,
        in_specs=[
            pl.BlockSpec((None, C, TM), lambda n, m: (n, 0, m)),
            pl.BlockSpec((Cout, Cin), lambda n, m: (0, 0)),
            pl.BlockSpec((Cout, 1), lambda n, m: (0, 0)),
        ],
        out_specs=pl.BlockSpec((None, Cout, TM), lambda n, m: (n, 0, m)),
        compiler_params=pltpu.CompilerParams(
            dimension_semantics=("parallel", "parallel")),
    )(x3, w_oc_ic, b2)

    return out3.reshape(N, Cout, H, W)    # contiguous, free reshape


def add_nchw(a_nchw, b_nchw, *, tile_l=4096):
    """Elementwise add (node transition), lane-dense as (N, C*H*W)."""
    N, C, H, W = a_nchw.shape
    L = C * H * W
    TL = _pick_tile(L, tile_l)
    grid = (L // TL,)
    a2 = a_nchw.reshape(N, L)
    b2 = b_nchw.reshape(N, L)
    out2 = pl.pallas_call(
        _add_kernel,
        out_shape=jax.ShapeDtypeStruct((N, L), a_nchw.dtype),
        grid=grid,
        in_specs=[
            pl.BlockSpec((N, TL), lambda i: (0, i)),
            pl.BlockSpec((N, TL), lambda i: (0, i)),
        ],
        out_specs=pl.BlockSpec((N, TL), lambda i: (0, i)),
        compiler_params=pltpu.CompilerParams(
            dimension_semantics=("parallel",)),
    )(a2, b2)
    return out2.reshape(N, C, H, W)


# ----------------------------------------------------------------------------
# Minimal DAG container (stand-in for networkx.MultiDiGraph, no dependency)
# ----------------------------------------------------------------------------
class MiniDAG:
    def __init__(self):
        self.nodes = {}          # node_id -> attr dict
        self.edges = {}          # (start, end, id) -> attr dict

    def add_node(self, v, **attrs):
        self.nodes[v] = dict(attrs)

    def add_edge(self, start, end, key, **attrs):
        self.edges[(start, end, key)] = dict(attrs)

    def predecessors(self, v):
        return sorted({s for (s, e, _) in self.edges if e == v})

    def successors(self, v):
        return sorted({e for (s, e, _) in self.edges if s == v})


# ----------------------------------------------------------------------------
# graph_forward / Segment semantics (Python glue; compute is in Pallas above)
# ----------------------------------------------------------------------------
def dict_to_tuple(d):
    l = []
    for s, ind in d:
        tensor = d[s, ind]
        l.append(tensor)
        l.append(jnp.array([float(s)], dtype=jnp.float32))
        l.append(jnp.array([float(ind)], dtype=jnp.float32))
    return tuple(l)


def tuple_to_dict(t):
    # NOTE: int() on the bookkeeping entries is only valid when those entries
    # are concrete Python/host values (not traced); the demo graph returns a
    # plain tensor at the target so this path is never hit under jit.
    l = list(t)
    num = len(l) // 3
    d = {}
    for i in range(num):
        tensor, s, ind = (t[i * 3], t[i * 3 + 1], t[i * 3 + 2])
        d[int(s), int(ind)] = tensor
    return d


def segment_checkpoint_forward(segment):
    def custom_forward(*inputs):
        return segment(*inputs)
    return custom_forward


def graph_forward(x, G=None, source=None, target=None, successors_dict=None,
                  predecessors_dict=None, edges_dict=None, do_checkpoint=True):
    tensor_dict = {source: x}
    queue = Queue()
    queue.put(source)
    while not queue.empty():
        vertex_key = queue.get()
        for target_vertex_id in successors_dict[vertex_key]:
            edges = edges_dict[vertex_key, target_vertex_id]
            target_vertex = G.nodes[target_vertex_id]
            outputs = {}
            for id in edges:
                op = edges[id]['module']
                input = tensor_dict[vertex_key]
                if do_checkpoint:
                    # jax.checkpoint is the JAX analogue of torch checkpoint
                    output = jax.checkpoint(segment_checkpoint_forward(op))(input)
                else:
                    output = op(input)
                if type(output) == tuple:
                    output = tuple_to_dict(output)
                    for key in output:
                        outputs[key] = output[key]
                else:
                    outputs[vertex_key, id] = output
            transition = target_vertex.get('transition', None)
            if transition is None:
                tensor_dict[target_vertex_id] = outputs[list(outputs.keys())[0]]
                queue.put(target_vertex_id)
            else:
                transition_input_order = target_vertex['transition_input_order']
                num_input = len(transition_input_order)
                inputs_for_transit = tensor_dict.get(target_vertex_id, {})
                for key in outputs:
                    inputs_for_transit[key] = outputs[key]
                if len(inputs_for_transit) == num_input:
                    inputs = [inputs_for_transit[i] for i in transition_input_order]
                    tensor_dict[target_vertex_id] = transition(inputs)
                    queue.put(target_vertex_id)
                else:
                    tensor_dict[target_vertex_id] = inputs_for_transit
    if type(tensor_dict[target]) == dict:
        return dict_to_tuple(tensor_dict[target])
    else:
        return tensor_dict[target]


class Segment:
    """wrapper class for inference with DAG (JAX/Pallas version)."""

    def __init__(self, G, source, target, do_checkpoint=False):
        self.G = G
        self.source = source
        self.target = target
        self.info_dict = self.prepare_for_forward(G, source, target, do_checkpoint)

    def prepare_for_forward(self, G, source, target, do_checkpoint):
        info_dict = {'G': G, 'source': source, 'target': target}
        successors_dict, predecessors_dict, edges_dict = ({}, {}, {})
        for v in G.nodes:
            predecessors_dict[v] = [n for n in G.predecessors(v)]
            successors_dict[v] = [n for n in G.successors(v)]
        for key in G.edges:
            e = G.edges[key]
            start, end, id = key
            if (start, end) not in edges_dict:
                edges_dict[start, end] = {}
            edges_dict[start, end][id] = e
        info_dict.update(successors_dict=successors_dict,
                         predecessors_dict=predecessors_dict,
                         edges_dict=edges_dict,
                         do_checkpoint=do_checkpoint)
        return info_dict

    def forward(self, x):
        return graph_forward(x, **self.info_dict)

    __call__ = forward


# ----------------------------------------------------------------------------
# Build a small deterministic synthetic DAG whose edge modules are Pallas ops
# ----------------------------------------------------------------------------
def make_conv_params(key, cin, cout):
    kw, kb = jax.random.split(key)
    w = jax.random.normal(kw, (cout, cin), jnp.float32) * 0.1   # (Cout, Cin)
    b = jax.random.normal(kb, (cout,), jnp.float32) * 0.1
    return w, b


def build_graph(channels):
    root = jax.random.PRNGKey(42)
    k0, k1, k2, k3 = jax.random.split(root, 4)

    params = {
        (0, 1, 0): make_conv_params(k0, channels, channels),
        (1, 2, 0): make_conv_params(k1, channels, channels),
        (1, 2, 1): make_conv_params(k2, channels, channels),
        (2, 3, 0): make_conv_params(k3, channels, channels),
    }

    def conv_module(key, relu):
        w, b = params[key]
        return lambda x: conv1x1_nchw(x, w, b, relu=relu)

    G = MiniDAG()
    # nodes: 0 (source) -> 1 -> 2 (merge via add transition) -> 3 (target)
    G.add_node(0)
    G.add_node(1)
    G.add_node(2,
               transition=lambda inputs: add_nchw(inputs[0], inputs[1]),
               transition_input_order=[(1, 0), (1, 1)])
    G.add_node(3)

    # edge modules (1x1 conv + relu), each a lane-dense tiled Pallas kernel
    G.add_edge(0, 1, 0, module=conv_module((0, 1, 0), relu=True))
    G.add_edge(1, 2, 0, module=conv_module((1, 2, 0), relu=True))
    G.add_edge(1, 2, 1, module=conv_module((1, 2, 1), relu=True))
    G.add_edge(2, 3, 0, module=conv_module((2, 3, 0), relu=False))
    return G, params


# ----------------------------------------------------------------------------
# Pure-JAX reference of the same DAG computation (for correctness checking)
# ----------------------------------------------------------------------------
def reference_forward(x, params):
    def conv(h, w, b, relu):
        y = jnp.einsum('oc,nchw->nohw', w, h,
                       precision=jax.lax.Precision.HIGHEST)
        y = y + b[None, :, None, None]
        return jnp.maximum(y, 0.0) if relu else y

    h1 = conv(x, *params[(0, 1, 0)], True)
    y0 = conv(h1, *params[(1, 2, 0)], True)
    y1 = conv(h1, *params[(1, 2, 1)], True)
    h2 = y0 + y1
    return conv(h2, *params[(2, 3, 0)], False)


if __name__ == "__main__":
    N, C, H, W = 2, 4, 16, 16  # NCHW, matching the PyTorch convention
    x = jax.random.normal(jax.random.PRNGKey(0), (N, C, H, W), jnp.float32)

    G, params = build_graph(C)
    seg = Segment(G, source=0, target=3, do_checkpoint=False)

    # One jitted program: all pallas_calls + reshapes compile together,
    # removing per-op Python dispatch and HBM writeback between ops.
    forward = jax.jit(seg.forward)

    out = forward(x)
    out = jax.block_until_ready(out)

    assert out.shape == (N, C, H, W), out.shape

    ref = reference_forward(x, params)
    ref = jax.block_until_ready(ref)
    assert bool(jnp.allclose(out, ref, rtol=1e-4, atol=1e-5)), (
        float(jnp.max(jnp.abs(out - ref))))

    print("KERNEL_OK")
</pallas_src>

<mosaic_0001>
module attributes {stable_mosaic.version = 11 : i64} {
  func.func @_conv1x1_kernel(%arg0: i32, %arg1: i32, %arg2: memref<1x4x256xf32, #tpu.memory_space<vmem>>, %arg3: memref<4x4xf32, #tpu.memory_space<vmem>>, %arg4: memref<4x1xf32, #tpu.memory_space<vmem>>, %arg5: memref<1x4x256xf32, #tpu.memory_space<vmem>>) attributes {dimension_semantics = [#tpu.dimension_semantics<parallel>, #tpu.dimension_semantics<parallel>], iteration_bounds = array<i64: 2, 1>, scalar_prefetch = 0 : i64, scratch_operands = 0 : i64, tpu.core_type = #tpu.core_type<tc>, window_params = [{transform_indices = @transform_0, window_bounds = array<i64: 1, 4, 256>}, {pipeline_mode = #tpu.pipeline_mode<synchronous>, transform_indices = @transform_1, window_bounds = array<i64: 4, 4>}, {pipeline_mode = #tpu.pipeline_mode<synchronous>, transform_indices = @transform_2, window_bounds = array<i64: 4, 1>}, {transform_indices = @transform_3, window_bounds = array<i64: 1, 4, 256>}]} {
    %c0 = arith.constant 0 : index
    %c0_0 = arith.constant 0 : index
    %c0_1 = arith.constant 0 : index
    %0 = vector.load %arg2[%c0, %c0_0, %c0_1] : memref<1x4x256xf32, #tpu.memory_space<vmem>>, vector<1x4x256xf32>
    %1 = vector.shape_cast %0 : vector<1x4x256xf32> to vector<4x256xf32>
    %c0_2 = arith.constant 0 : index
    %c0_3 = arith.constant 0 : index
    %2 = vector.load %arg3[%c0_2, %c0_3] : memref<4x4xf32, #tpu.memory_space<vmem>>, vector<4x4xf32>
    %c0_4 = arith.constant 0 : index
    %c0_5 = arith.constant 0 : index
    %3 = vector.load %arg4[%c0_4, %c0_5] : memref<4x1xf32, #tpu.memory_space<vmem>>, vector<4x1xf32>
    %cst = arith.constant 0.000000e+00 : f32
    %4 = vector.broadcast %cst : f32 to vector<4x256xf32>
    %5 = vector.extract_strided_slice %2 {offsets = [0, 0], sizes = [4, 1], strides = [1, 1]} : vector<4x4xf32> to vector<4x1xf32>
    %6 = vector.extract_strided_slice %1 {offsets = [0, 0], sizes = [1, 256], strides = [1, 1]} : vector<4x256xf32> to vector<1x256xf32>
    %7 = vector.broadcast %5 : vector<4x1xf32> to vector<4x256xf32>
    %8 = vector.broadcast %6 : vector<1x256xf32> to vector<4x256xf32>
    %9 = arith.mulf %7, %8 : vector<4x256xf32>
    %10 = arith.addf %4, %9 : vector<4x256xf32>
    %11 = vector.extract_strided_slice %2 {offsets = [0, 1], sizes = [4, 1], strides = [1, 1]} : vector<4x4xf32> to vector<4x1xf32>
    %12 = vector.extract_strided_slice %1 {offsets = [1, 0], sizes = [1, 256], strides = [1, 1]} : vector<4x256xf32> to vector<1x256xf32>
    %13 = vector.broadcast %11 : vector<4x1xf32> to vector<4x256xf32>
    %14 = vector.broadcast %12 : vector<1x256xf32> to vector<4x256xf32>
    %15 = arith.mulf %13, %14 : vector<4x256xf32>
    %16 = arith.addf %10, %15 : vector<4x256xf32>
    %17 = vector.extract_strided_slice %2 {offsets = [0, 2], sizes = [4, 1], strides = [1, 1]} : vector<4x4xf32> to vector<4x1xf32>
    %18 = vector.extract_strided_slice %1 {offsets = [2, 0], sizes = [1, 256], strides = [1, 1]} : vector<4x256xf32> to vector<1x256xf32>
    %19 = vector.broadcast %17 : vector<4x1xf32> to vector<4x256xf32>
    %20 = vector.broadcast %18 : vector<1x256xf32> to vector<4x256xf32>
    %21 = arith.mulf %19, %20 : vector<4x256xf32>
    %22 = arith.addf %16, %21 : vector<4x256xf32>
    %23 = vector.extract_strided_slice %2 {offsets = [0, 3], sizes = [4, 1], strides = [1, 1]} : vector<4x4xf32> to vector<4x1xf32>
    %24 = vector.extract_strided_slice %1 {offsets = [3, 0], sizes = [1, 256], strides = [1, 1]} : vector<4x256xf32> to vector<1x256xf32>
    %25 = vector.broadcast %23 : vector<4x1xf32> to vector<4x256xf32>
    %26 = vector.broadcast %24 : vector<1x256xf32> to vector<4x256xf32>
    %27 = arith.mulf %25, %26 : vector<4x256xf32>
    %28 = arith.addf %22, %27 : vector<4x256xf32>
    %29 = vector.broadcast %3 : vector<4x1xf32> to vector<4x256xf32>
    %30 = arith.addf %28, %29 : vector<4x256xf32>
    %cst_6 = arith.constant 0.000000e+00 : f32
    %31 = vector.broadcast %cst_6 : f32 to vector<4x256xf32>
    %32 = arith.maximumf %30, %31 : vector<4x256xf32>
    %c0_7 = arith.constant 0 : index
    %c0_8 = arith.constant 0 : index
    %c0_9 = arith.constant 0 : index
    %33 = vector.load %arg5[%c0_7, %c0_8, %c0_9] : memref<1x4x256xf32, #tpu.memory_space<vmem>>, vector<1x4x256xf32>
    %34 = vector.shape_cast %33 : vector<1x4x256xf32> to vector<4x256xf32>
    %35 = vector.shape_cast %32 : vector<4x256xf32> to vector<1x4x256xf32>
    tpu.vector_store %arg5[%c0_7, %c0_8, %c0_9], %35 {strides = array<i32>} : memref<1x4x256xf32, #tpu.memory_space<vmem>>, vector<1x4x256xf32>,
    return
  }
  func.func @transform_0(%arg0: i32, %arg1: i32) -> (i32, i32, i32) {
    %c0_i32 = arith.constant 0 : i32
    %c0_i32_0 = arith.constant 0 : i32
    return %arg0, %c0_i32, %arg1 : i32, i32, i32
  }
  func.func @transform_1(%arg0: i32, %arg1: i32) -> (i32, i32) {
    %c0_i32 = arith.constant 0 : i32
    %c0_i32_0 = arith.constant 0 : i32
    %c0_i32_1 = arith.constant 0 : i32
    return %c0_i32, %c0_i32_0 : i32, i32
  }
  func.func @transform_2(%arg0: i32, %arg1: i32) -> (i32, i32) {
    %c0_i32 = arith.constant 0 : i32
    %c0_i32_0 = arith.constant 0 : i32
    %c0_i32_1 = arith.constant 0 : i32
    return %c0_i32, %c0_i32_0 : i32, i32
  }
  func.func @transform_3(%arg0: i32, %arg1: i32) -> (i32, i32, i32) {
    %c0_i32 = arith.constant 0 : i32
    %c0_i32_0 = arith.constant 0 : i32
    return %arg0, %c0_i32, %arg1 : i32, i32, i32
  }
}

module attributes {stable_mosaic.version = 11 : i64} {
  func.func @_add_kernel(%arg0: i32, %arg1: memref<2x1024xf32, #tpu.memory_space<vmem>>, %arg2: memref<2x1024xf32, #tpu.memory_space<vmem>>, %arg3: memref<2x1024xf32, #tpu.memory_space<vmem>>) attributes {dimension_semantics = [#tpu.dimension_semantics<parallel>], iteration_bounds = array<i64: 1>, scalar_prefetch = 0 : i64, scratch_operands = 0 : i64, tpu.core_type = #tpu.core_type<tc>, window_params = [{transform_indices = @transform_0, window_bounds = array<i64: 2, 1024>}, {transform_indices = @transform_1, window_bounds = array<i64: 2, 1024>}, {transform_indices = @transform_2, window_bounds = array<i64: 2, 1024>}]} {
    %c0 = arith.constant 0 : index
    %c0_0 = arith.constant 0 : index
    %0 = vector.load %arg1[%c0, %c0_0] : memref<2x1024xf32, #tpu.memory_space<vmem>>, vector<2x1024xf32>
    %c0_1 = arith.constant 0 : index
    %c0_2 = arith.constant 0 : index
    %1 = vector.load %arg2[%c0_1, %c0_2] : memref<2x1024xf32, #tpu.memory_space<vmem>>, vector<2x1024xf32>
    %2 = arith.addf %0, %1 : vector<2x1024xf32>
    %c0_3 = arith.constant 0 : index
    %c0_4 = arith.constant 0 : index
    %3 = vector.load %arg3[%c0_3, %c0_4] : memref<2x1024xf32, #tpu.memory_space<vmem>>, vector<2x1024xf32>
    tpu.vector_store %arg3[%c0_3, %c0_4], %2 {strides = array<i32>} : memref<2x1024xf32, #tpu.memory_space<vmem>>, vector<2x1024xf32>,
    return
  }
  func.func @transform_0(%arg0: i32) -> (i32, i32) {
    %c0_i32 = arith.constant 0 : i32
    %c0_i32_0 = arith.constant 0 : i32
    return %c0_i32, %arg0 : i32, i32
  }
  func.func @transform_1(%arg0: i32) -> (i32, i32) {
    %c0_i32 = arith.constant 0 : i32
    %c0_i32_0 = arith.constant 0 : i32
    return %c0_i32, %arg0 : i32, i32
  }
  func.func @transform_2(%arg0: i32) -> (i32, i32) {
    %c0_i32 = arith.constant 0 : i32
    %c0_i32_0 = arith.constant 0 : i32
    return %c0_i32, %arg0 : i32, i32
  }
}

module attributes {stable_mosaic.version = 11 : i64} {
  func.func @_conv1x1_kernel(%arg0: i32, %arg1: i32, %arg2: memref<1x4x256xf32, #tpu.memory_space<vmem>>, %arg3: memref<4x4xf32, #tpu.memory_space<vmem>>, %arg4: memref<4x1xf32, #tpu.memory_space<vmem>>, %arg5: memref<1x4x256xf32, #tpu.memory_space<vmem>>) attributes {dimension_semantics = [#tpu.dimension_semantics<parallel>, #tpu.dimension_semantics<parallel>], iteration_bounds = array<i64: 2, 1>, scalar_prefetch = 0 : i64, scratch_operands = 0 : i64, tpu.core_type = #tpu.core_type<tc>, window_params = [{transform_indices = @transform_0, window_bounds = array<i64: 1, 4, 256>}, {pipeline_mode = #tpu.pipeline_mode<synchronous>, transform_indices = @transform_1, window_bounds = array<i64: 4, 4>}, {pipeline_mode = #tpu.pipeline_mode<synchronous>, transform_indices = @transform_2, window_bounds = array<i64: 4, 1>}, {transform_indices = @transform_3, window_bounds = array<i64: 1, 4, 256>}]} {
    %c0 = arith.constant 0 : index
    %c0_0 = arith.constant 0 : index
    %c0_1 = arith.constant 0 : index
    %0 = vector.load %arg2[%c0, %c0_0, %c0_1] : memref<1x4x256xf32, #tpu.memory_space<vmem>>, vector<1x4x256xf32>
    %1 = vector.shape_cast %0 : vector<1x4x256xf32> to vector<4x256xf32>
    %c0_2 = arith.constant 0 : index
    %c0_3 = arith.constant 0 : index
    %2 = vector.load %arg3[%c0_2, %c0_3] : memref<4x4xf32, #tpu.memory_space<vmem>>, vector<4x4xf32>
    %c0_4 = arith.constant 0 : index
    %c0_5 = arith.constant 0 : index
    %3 = vector.load %arg4[%c0_4, %c0_5] : memref<4x1xf32, #tpu.memory_space<vmem>>, vector<4x1xf32>
    %cst = arith.constant 0.000000e+00 : f32
    %4 = vector.broadcast %cst : f32 to vector<4x256xf32>
    %5 = vector.extract_strided_slice %2 {offsets = [0, 0], sizes = [4, 1], strides = [1, 1]} : vector<4x4xf32> to vector<4x1xf32>
    %6 = vector.extract_strided_slice %1 {offsets = [0, 0], sizes = [1, 256], strides = [1, 1]} : vector<4x256xf32> to vector<1x256xf32>
    %7 = vector.broadcast %5 : vector<4x1xf32> to vector<4x256xf32>
    %8 = vector.broadcast %6 : vector<1x256xf32> to vector<4x256xf32>
    %9 = arith.mulf %7, %8 : vector<4x256xf32>
    %10 = arith.addf %4, %9 : vector<4x256xf32>
    %11 = vector.extract_strided_slice %2 {offsets = [0, 1], sizes = [4, 1], strides = [1, 1]} : vector<4x4xf32> to vector<4x1xf32>
    %12 = vector.extract_strided_slice %1 {offsets = [1, 0], sizes = [1, 256], strides = [1, 1]} : vector<4x256xf32> to vector<1x256xf32>
    %13 = vector.broadcast %11 : vector<4x1xf32> to vector<4x256xf32>
    %14 = vector.broadcast %12 : vector<1x256xf32> to vector<4x256xf32>
    %15 = arith.mulf %13, %14 : vector<4x256xf32>
    %16 = arith.addf %10, %15 : vector<4x256xf32>
    %17 = vector.extract_strided_slice %2 {offsets = [0, 2], sizes = [4, 1], strides = [1, 1]} : vector<4x4xf32> to vector<4x1xf32>
    %18 = vector.extract_strided_slice %1 {offsets = [2, 0], sizes = [1, 256], strides = [1, 1]} : vector<4x256xf32> to vector<1x256xf32>
    %19 = vector.broadcast %17 : vector<4x1xf32> to vector<4x256xf32>
    %20 = vector.broadcast %18 : vector<1x256xf32> to vector<4x256xf32>
    %21 = arith.mulf %19, %20 : vector<4x256xf32>
    %22 = arith.addf %16, %21 : vector<4x256xf32>
    %23 = vector.extract_strided_slice %2 {offsets = [0, 3], sizes = [4, 1], strides = [1, 1]} : vector<4x4xf32> to vector<4x1xf32>
    %24 = vector.extract_strided_slice %1 {offsets = [3, 0], sizes = [1, 256], strides = [1, 1]} : vector<4x256xf32> to vector<1x256xf32>
    %25 = vector.broadcast %23 : vector<4x1xf32> to vector<4x256xf32>
    %26 = vector.broadcast %24 : vector<1x256xf32> to vector<4x256xf32>
    %27 = arith.mulf %25, %26 : vector<4x256xf32>
    %28 = arith.addf %22, %27 : vector<4x256xf32>
    %29 = vector.broadcast %3 : vector<4x1xf32> to vector<4x256xf32>
    %30 = arith.addf %28, %29 : vector<4x256xf32>
    %c0_6 = arith.constant 0 : index
    %c0_7 = arith.constant 0 : index
    %c0_8 = arith.constant 0 : index
    %31 = vector.load %arg5[%c0_6, %c0_7, %c0_8] : memref<1x4x256xf32, #tpu.memory_space<vmem>>, vector<1x4x256xf32>
    %32 = vector.shape_cast %31 : vector<1x4x256xf32> to vector<4x256xf32>
    %33 = vector.shape_cast %30 : vector<4x256xf32> to vector<1x4x256xf32>
    tpu.vector_store %arg5[%c0_6, %c0_7, %c0_8], %33 {strides = array<i32>} : memref<1x4x256xf32, #tpu.memory_space<vmem>>, vector<1x4x256xf32>,
    return
  }
  func.func @transform_0(%arg0: i32, %arg1: i32) -> (i32, i32, i32) {
    %c0_i32 = arith.constant 0 : i32
    %c0_i32_0 = arith.constant 0 : i32
    return %arg0, %c0_i32, %arg1 : i32, i32, i32
  }
  func.func @transform_1(%arg0: i32, %arg1: i32) -> (i32, i32) {
    %c0_i32 = arith.constant 0 : i32
    %c0_i32_0 = arith.constant 0 : i32
    %c0_i32_1 = arith.constant 0 : i32
    return %c0_i32, %c0_i32_0 : i32, i32
  }
  func.func @transform_2(%arg0: i32, %arg1: i32) -> (i32, i32) {
    %c0_i32 = arith.constant 0 : i32
    %c0_i32_0 = arith.constant 0 : i32
    %c0_i32_1 = arith.constant 0 : i32
    return %c0_i32, %c0_i32_0 : i32, i32
  }
  func.func @transform_3(%arg0: i32, %arg1: i32) -> (i32, i32, i32) {
    %c0_i32 = arith.constant 0 : i32
    %c0_i32_0 = arith.constant 0 : i32
    return %arg0, %c0_i32, %arg1 : i32, i32, i32
  }
}

</mosaic_0001>

<llo_original>
// kernel: forward.5
$region0: #{forward.5}
  #allocation0 [shape = 'u32[]', space=smem, size = 0x4, offset = 0x4, fixed_abs, tag = 'smem constant byte address 0x4 - core index']
  #allocation1 [shape = 'u32[72,128]{1,0:T(1,128)}', space=vmem, size = 0x9000, scoped, tag = 'internal scratch']
  %s0 = inlined_call_operand.vmem [shape: f32[2,4,256], index: 0, kind: input, shape index: {}]
  %s1 = inlined_call_operand.vmem [shape: f32[4,4], index: 1, kind: input, shape index: {}]
  %s2 = inlined_call_operand.vmem [shape: f32[4,1], index: 2, kind: input, shape index: {}]
  %s3 = inlined_call_operand.vmem [shape: f32[2,4,256], index: 3, kind: output, shape index: {}]
  %s4 = sld [smem:[#allocation0]]
  $region45: #{forward.5} parent=0
    _
  %s6 = ssub.s32 1, %s4
  %s7 = scalar_select 0, %s6, %s4
  loop: start=0, step=1, limit=4
  $region2: #{forward.5} parent=0 // loop_pre_header
    _
  $region3: #{forward.5} parent=0 // loop_header
    %s9 = sphi 0, %s13
    %p10 = scmp.ge.s32.totalorder %s9, 4
    %s16 = sphi 0, %s28
    %s17 = sphi 0, %s24
    %s18 = sphi 0, %s16
    %s19 = sphi 0, %s17
    %s20 = sphi 0, %s18
    %s21 = sphi 0, %s19
    %s33 = sphi 0, %s35
    %s36 = sphi 0, %s33
    %s37 = sphi 0, %s36
    %s53 = sphi 0, %s37
    %s57 = sphi 0, %s57
    %s59 = sphi 0, %s57
    %s60 = sphi 0, %s59
    %s74 = sphi 0, %s60
    %s78 = sphi 0, %s78
    %s80 = sphi 0, %s78
    %s81 = sphi 0, %s80
    %s95 = sphi 0, %s81
    %s103 = sphi 0, %s105
    %s106 = sphi 0, %s103
    %s107 = sphi 0, %s106
    %s123 = sphi 0, %s107
  $region4: #{forward.5} parent=0 // loop_header_branch
    %12 = sbr.rel (%p10) target = $region8
  $region5: #{forward.5} parent=0 // loop_body
    %s14 = ssub.s32 %s9, 1
    %s15 = ssub.s32 %s9, 2
    %s22 = sadd.s32 1, %s17
    %p23 = scmp.ge.s32.totalorder %s22, 1
    %s24 = scalar_select %p23, 0, %s22
    %s25 = sadd.s32 1, %s16
    %s26 = scalar_select %p23, %s25, %s16
    %p27 = scmp.ge.s32.totalorder %s26, 2
    %s28 = scalar_select %p27, 0, %s26
    %s29 = ssub.s32 %s16, %s28
    %s30 = ssub.s32 %s17, %s24
    %s31 = sor.u32 %s29, %s30
    %p32 = scmp.eq.s32.totalorder %s31, 0
    %s34 = sadd.s32 %s33, 1
    %s35 = scalar_select %p32, %s33, %s34
    %p38 = pneg %p32
    %p39 = scmp.eq.s32.totalorder %s9, 1
    %p40 = por %p38, %p39
    %p41 = scmp.ne.s32.totalorder %s33, %s36
    %p42 = scmp.eq.s32.totalorder %s9, 0
    %p43 = por %p41, %p42
    %p44 = scmp.ne.s32.totalorder %s33, %s36
    %p45 = scmp.eq.s32.totalorder %s14, 1
    %p46 = por %p44, %p45
    %p47 = scmp.ne.s32.totalorder %s36, %s37
    %p48 = scmp.eq.s32.totalorder %s14, 0
    %p49 = por %p47, %p48
    %p50 = scmp.ne.s32.totalorder %s36, %s37
    %p51 = scmp.eq.s32.totalorder %s15, 1
    %p52 = por %p50, %p51
    %p54 = scmp.ne.s32.totalorder %s37, %s53
    %p55 = scmp.eq.s32.totalorder %s15, 0
    %p56 = por %p54, %p55
    %s58 = sadd.s32 %s57, 1
    %p61 = scmp.eq.s32.totalorder %s9, 1
    %p62 = scmp.ne.s32.totalorder %s57, %s59
    %p63 = scmp.eq.s32.totalorder %s9, 0
    %p64 = por %p62, %p63
    %p65 = scmp.ne.s32.totalorder %s57, %s59
    %p66 = scmp.eq.s32.totalorder %s14, 1
    %p67 = por %p65, %p66
    %p68 = scmp.ne.s32.totalorder %s59, %s60
    %p69 = scmp.eq.s32.totalorder %s14, 0
    %p70 = por %p68, %p69
    %p71 = scmp.ne.s32.totalorder %s59, %s60
    %p72 = scmp.eq.s32.totalorder %s15, 1
    %p73 = por %p71, %p72
    %p75 = scmp.ne.s32.totalorder %s60, %s74
    %p76 = scmp.eq.s32.totalorder %s15, 0
    %p77 = por %p75, %p76
    %s79 = sadd.s32 %s78, 1
    %p82 = scmp.eq.s32.totalorder %s9, 1
    %p83 = scmp.ne.s32.totalorder %s78, %s80
    %p84 = scmp.eq.s32.totalorder %s9, 0
    %p85 = por %p83, %p84
    %p86 = scmp.ne.s32.totalorder %s78, %s80
    %p87 = scmp.eq.s32.totalorder %s14, 1
    %p88 = por %p86, %p87
    %p89 = scmp.ne.s32.totalorder %s80, %s81
    %p90 = scmp.eq.s32.totalorder %s14, 0
    %p91 = por %p89, %p90
    %p92 = scmp.ne.s32.totalorder %s80, %s81
    %p93 = scmp.eq.s32.totalorder %s15, 1
    %p94 = por %p92, %p93
    %p96 = scmp.ne.s32.totalorder %s81, %s95
    %p97 = scmp.eq.s32.totalorder %s15, 0
    %p98 = por %p96, %p97
    %s99 = ssub.s32 %s16, %s28
    %s100 = ssub.s32 %s17, %s24
    %s101 = sor.u32 %s99, %s100
    %p102 = scmp.eq.s32.totalorder %s101, 0
    %s104 = sadd.s32 %s103, 1
    %s105 = scalar_select %p102, %s103, %s104
    %p108 = pneg %p102
    %p109 = scmp.eq.s32.totalorder %s9, 1
    %p110 = por %p108, %p109
    %p111 = scmp.ne.s32.totalorder %s103, %s106
    %p112 = scmp.eq.s32.totalorder %s9, 0
    %p113 = por %p111, %p112
    %p114 = scmp.ne.s32.totalorder %s103, %s106
    %p115 = scmp.eq.s32.totalorder %s14, 1
    %p116 = por %p114, %p115
    %p117 = scmp.ne.s32.totalorder %s106, %s107
    %p118 = scmp.eq.s32.totalorder %s14, 0
    %p119 = por %p117, %p118
    %p120 = scmp.ne.s32.totalorder %s106, %s107
    %p121 = scmp.eq.s32.totalorder %s15, 1
    %p122 = por %p120, %p121
    %p124 = scmp.ne.s32.totalorder %s107, %s123
    %p125 = scmp.eq.s32.totalorder %s15, 0
    %p126 = por %p124, %p125
    %p127 = scmp.le.s32.totalorder 1, %s9
    %p128 = scmp.lt.s32.totalorder %s9, 3
    %p129 = pnand %p127, %p128
    %p130 = pneg %p129
    // Predicated region
    $region9: #{forward.5} parent=5 // pred_check
      _
    $region10: #{forward.5} parent=5 // pred_check_branch
      %132 = sbr.rel (%p129) target = $region12
    $region11: #{forward.5} parent=5 // pred_region
      %s133 = ssub.s32 %s9, 1
      // Predicated region
      $region13: #{forward.5} parent=11 // pred_check
        %p134 = pneg %p70
      $region14: #{forward.5} parent=11 // pred_check_branch
        %136 = sbr.rel (%p134) target = $region16
      $region15: #{forward.5} parent=11 // pred_region
        _
      $region16: #{forward.5} parent=11 // pred_fallthru
        _
      // Predicated region
      $region17: #{forward.5} parent=11 // pred_check
        %p137 = pneg %p91
      $region18: #{forward.5} parent=11 // pred_check_branch
        %139 = sbr.rel (%p137) target = $region20
      $region19: #{forward.5} parent=11 // pred_region
        _
      $region20: #{forward.5} parent=11 // pred_fallthru
        _
    $region12: #{forward.5} parent=5 // pred_fallthru
      _
    %p140 = scmp.lt.s32.totalorder %s9, 2
    // Predicated region
    $region21: #{forward.5} parent=5 // pred_check
      %p141 = pneg %p140
    $region22: #{forward.5} parent=5 // pred_check_branch
      %143 = sbr.rel (%p141) target = $region24
    $region23: #{forward.5} parent=5 // pred_region
      // Predicated region
      $region25: #{forward.5} parent=23 // pred_check
        %p144 = pneg %p43
      $region26: #{forward.5} parent=23 // pred_check_branch
        %146 = sbr.rel (%p144) target = $region28
      $region27: #{forward.5} parent=23 // pred_region
        %s147 = smul.u32 2, %s17
        %p148 = scmp.lt.s32.totalorder %s16, 1
        %s149 = scalar_select %p148, %s16, 1
        %p150 = scmp.lt.s32.totalorder %s147, 1
        %s151 = scalar_select %p150, %s147, 1
        %s152 = smul.addr %s149, 2
        %s153 = sadd.s32 %s151, %s152
        %s154 = smul.addr %s153, 4
        %s155 = scalar_lea.vmem %s0, %s154
        %s156 = smul.u32 2, %s17
      $region28: #{forward.5} parent=23 // pred_fallthru
        _
    $region24: #{forward.5} parent=5 // pred_fallthru
      _
    %p157 = scmp.le.s32.totalorder 1, %s9
    %p158 = scmp.lt.s32.totalorder %s9, 3
    %p159 = pnand %p157, %p158
    %p160 = pneg %p159
    // Predicated region
    $region29: #{forward.5} parent=5 // pred_check
      _
    $region30: #{forward.5} parent=5 // pred_check_branch
      %162 = sbr.rel (%p159) target = $region32
    $region31: #{forward.5} parent=5 // pred_region
      %s163 = ssub.s32 %s9, 1
      %s164 = smul.u32 2, %s19
      %p165 = scmp.lt.s32.totalorder %s18, 1
      %s166 = scalar_select %p165, %s18, 1
      %p167 = scmp.lt.s32.totalorder %s164, 1
      %s168 = scalar_select %p167, %s164, 1
      %s169 = smul.addr %s166, 2
      %s170 = sadd.s32 %s168, %s169
      %s171 = smul.addr %s170, 4
      %s172 = scalar_lea.vmem %s0, %s171
      %p173 = pneg %p49
      %p174 = pneg %p46
      %p175 = pneg %p70
      %p176 = pneg %p67
      %p177 = pneg %p91
      %p178 = pneg %p88
      %p179 = pneg %p119
      %p180 = pneg %p116
      %s181 = smul.u32 2, %s19
      %p182 = scmp.lt.s32.totalorder %s18, 1
      %s183 = scalar_select %p182, %s18, 1
      %p184 = scmp.lt.s32.totalorder %s181, 1
      %s185 = scalar_select %p184, %s181, 1
      %s186 = smul.addr %s183, 2
      %s187 = sadd.s32 %s185, %s186
      %s188 = smul.addr %s187, 4
      %s189 = scalar_lea.vmem %s3, %s188
      %s190 = smul.u32 2, %s19
      %p191 = scmp.lt.s32.totalorder %s18, 1
      %s192 = scalar_select %p191, %s18, 1
      %p193 = scmp.lt.s32.totalorder %s190, 1
      %s194 = scalar_select %p193, %s190, 1
      %s195 = smul.addr %s192, 2
      %s196 = sadd.s32 %s194, %s195
      %s197 = smul.addr %s196, 4
      %s198 = scalar_lea.vmem %s0, %s197
      %s199 = smul.u32 2, %s19
      %s200 = smul.u32 2, %s19
      %p201 = scmp.lt.s32.totalorder %s18, 1
      %s202 = scalar_select %p201, %s18, 1
      %p203 = scmp.lt.s32.totalorder %s200, 1
      %s204 = scalar_select %p203, %s200, 1
      %s205 = smul.addr %s202, 2
      %s206 = sadd.s32 %s204, %s205
      %s207 = smul.addr %s206, 4
      %s208 = scalar_lea.vmem %s3, %s207
      %s209 = smul.u32 2, %s19
      %v210 = vld [vmem:[%s198] sm:$0xff]
      %v211 = vld [vmem:[%s1] sm:$0xf]
      %v212 = vld [vmem:[%s2] sm:$0xf]
      %214 = vset.pattern.permute.xlu0 0
      %215 = vperm.xlu0 %214, %v211
      %v216 = vpop.permute.xlu0 %215
      %v219 = vperm.slane %v210, 0
      %v220 = vperm.slane %v210, 4
      %v223 = vperm.slane %v219, 0
      %v224 = vperm.slane %v220, 0
      %v225 = vmul.f32 %v216, %v223
      %v226 = vmul.f32 %v216, %v224
      %v227 = vadd.f32 %v225, 0.0
      %v228 = vadd.f32 %v226, 0.0
      %229 = vset.pattern.permute.xlu0 1
      %230 = vperm.xlu0 %229, %v211
      %v231 = vpop.permute.xlu0 %230
      %v233 = vperm.slane %v210, 1
      %v234 = vperm.slane %v210, 5
      %v237 = vperm.slane %v233, 1
      %v238 = vperm.slane %v234, 1
      %v239 = vmul.f32 %v231, %v237
      %v240 = vmul.f32 %v231, %v238
      %v241 = vadd.f32 %v227, %v239
      %v242 = vadd.f32 %v228, %v240
      %243 = vset.pattern.permute.xlu0 2
      %244 = vperm.xlu0 %243, %v211
      %v245 = vpop.permute.xlu0 %244
      %v247 = vperm.slane %v210, 2
      %v248 = vperm.slane %v210, 6
      %v251 = vperm.slane %v247, 2
      %v252 = vperm.slane %v248, 2
      %v253 = vmul.f32 %v245, %v251
      %v254 = vmul.f32 %v245, %v252
      %v255 = vadd.f32 %v241, %v253
      %v256 = vadd.f32 %v242, %v254
      %257 = vset.pattern.permute.xlu0 3
      %258 = vperm.xlu0 %257, %v211
      %v259 = vpop.permute.xlu0 %258
      %v261 = vperm.slane %v210, 3
      %v262 = vperm.slane %v210, 7
      %v265 = vperm.slane %v261, 3
      %v266 = vperm.slane %v262, 3
      %v267 = vmul.f32 %v259, %v265
      %v268 = vmul.f32 %v259, %v266
      %v269 = vadd.f32 %v255, %v267
      %v270 = vadd.f32 %v256, %v268
      %272 = vset.pattern.permute.xlu0 0
      %273 = vperm.xlu0 %272, %v212
      %v274 = vpop.permute.xlu0 %273
      %v276 = vadd.f32 %v269, %v274
      %v277 = vadd.f32 %v270, %v274
      %v278 = vmax.f32 %v276, 0.0
      %v279 = vmax.f32 %v277, 0.0
      %v282 = vrot.slane %v279, 4
      %vm283 = vcmask 1043456
      %v284 = vsel %vm283, %v278, %v282
      %286 = vst [vmem:[%s208] sm:$0xff] %v284
      %s287 = smul.u32 2, %s19
      %p288 = scmp.lt.s32.totalorder %s18, 1
      %s289 = scalar_select %p288, %s18, 1
      %p290 = scmp.lt.s32.totalorder %s287, 1
      %s291 = scalar_select %p290, %s287, 1
      %s292 = smul.addr %s289, 2
      %s293 = sadd.s32 %s291, %s292
      %s294 = smul.addr %s293, 4
      %s295 = scalar_lea.vmem %s3, %s294
      // Predicated region
      $region33: #{forward.5} parent=31 // pred_check
        %p296 = pneg %p116
      $region34: #{forward.5} parent=31 // pred_check_branch
        %298 = sbr.rel (%p296) target = $region36
      $region35: #{forward.5} parent=31 // pred_region
        %s299 = smul.u32 2, %s19
      $region36: #{forward.5} parent=31 // pred_fallthru
        _
    $region32: #{forward.5} parent=5 // pred_fallthru
      _
    %p300 = scmp.le.s32.totalorder 2, %s9
    // Predicated region
    $region37: #{forward.5} parent=5 // pred_check
      %p301 = pneg %p300
    $region38: #{forward.5} parent=5 // pred_check_branch
      %303 = sbr.rel (%p301) target = $region40
    $region39: #{forward.5} parent=5 // pred_region
      %s304 = ssub.s32 %s9, 2
      // Predicated region
      $region41: #{forward.5} parent=39 // pred_check
        %p305 = pneg %p122
      $region42: #{forward.5} parent=39 // pred_check_branch
        %307 = sbr.rel (%p305) target = $region44
      $region43: #{forward.5} parent=39 // pred_region
        %s308 = smul.u32 2, %s21
        %p309 = scmp.lt.s32.totalorder %s20, 1
        %s310 = scalar_select %p309, %s20, 1
        %p311 = scmp.lt.s32.totalorder %s308, 1
        %s312 = scalar_select %p311, %s308, 1
        %s313 = smul.addr %s310, 2
        %s314 = sadd.s32 %s312, %s313
        %s315 = smul.addr %s314, 4
        %s316 = scalar_lea.vmem %s3, %s315
      $region44: #{forward.5} parent=39 // pred_fallthru
        _
    $region40: #{forward.5} parent=5 // pred_fallthru
      _
  $region6: #{forward.5} parent=0 // loop_footer
    %s13 = sadd.s32 1, %s9
  $region7: #{forward.5} parent=0 // loop_footer_branch
    %8 = sbr.rel target = $region3
  $region8: #{forward.5} parent=0 // loop_exit
    _

// kernel: forward.8
$region0: #{forward.8}
  #allocation0 [shape = 'u32[]', space=smem, size = 0x4, offset = 0x4, fixed_abs, tag = 'smem constant byte address 0x4 - core index']
  #allocation1 [shape = 'u32[72,128]{1,0:T(1,128)}', space=vmem, size = 0x9000, scoped, tag = 'internal scratch']
  %s0 = inlined_call_operand.vmem [shape: f32[2,1024], index: 0, kind: input, shape index: {}]
  %s1 = inlined_call_operand.vmem [shape: f32[2,1024], index: 1, kind: input, shape index: {}]
  %s2 = inlined_call_operand.vmem [shape: f32[2,1024], index: 2, kind: output, shape index: {}]
  %s3 = sld [smem:[#allocation0]]
  $region18: #{forward.8} parent=0
    _
  %s5 = ssub.s32 1, %s3
  %s6 = scalar_select 0, %s5, %s3
  // Predicated region
  $region2: #{forward.8} parent=0 // pred_check
    _
  $region3: #{forward.8} parent=0 // pred_check_branch
    %8 = sbr.rel (0) target = $region5
  $region4: #{forward.8} parent=0 // pred_region
    _
  $region5: #{forward.8} parent=0 // pred_fallthru
    _
  // Predicated region
  $region6: #{forward.8} parent=0 // pred_check
    _
  $region7: #{forward.8} parent=0 // pred_check_branch
    %10 = sbr.rel (0) target = $region9
  $region8: #{forward.8} parent=0 // pred_region
    _
  $region9: #{forward.8} parent=0 // pred_fallthru
    _
  %v11 = vld [vmem:[%s0] sm:$0xff]
  %v12 = vld [vmem:[%s0 + $0x8] sm:$0xff]
  %v13 = vld [vmem:[%s1] sm:$0xff]
  %v14 = vld [vmem:[%s1 + $0x8] sm:$0xff]
  %v15 = vadd.f32 %v11, %v13
  %v16 = vadd.f32 %v12, %v14
  %17 = vst [vmem:[%s2] sm:$0xff] %v15
  %18 = vst [vmem:[%s2 + $0x8] sm:$0xff] %v16
  // Predicated region
  $region10: #{forward.8} parent=0 // pred_check
    _
  $region11: #{forward.8} parent=0 // pred_check_branch
    %20 = sbr.rel (0) target = $region13
  $region12: #{forward.8} parent=0 // pred_region
    _
  $region13: #{forward.8} parent=0 // pred_fallthru
    _
  // Predicated region
  $region14: #{forward.8} parent=0 // pred_check
    _
  $region15: #{forward.8} parent=0 // pred_check_branch
    %22 = sbr.rel (0) target = $region17
  $region16: #{forward.8} parent=0 // pred_region
    _
  $region17: #{forward.8} parent=0 // pred_fallthru
    _

// kernel: forward.9
$region0: #{forward.9}
  #allocation0 [shape = 'u32[]', space=smem, size = 0x4, offset = 0x4, fixed_abs, tag = 'smem constant byte address 0x4 - core index']
  #allocation1 [shape = 'u32[72,128]{1,0:T(1,128)}', space=vmem, size = 0x9000, scoped, tag = 'internal scratch']
  %s0 = inlined_call_operand.vmem [shape: f32[2,4,256], index: 0, kind: input, shape index: {}]
  %s1 = inlined_call_operand.vmem [shape: f32[4,4], index: 1, kind: input, shape index: {}]
  %s2 = inlined_call_operand.vmem [shape: f32[4,1], index: 2, kind: input, shape index: {}]
  %s3 = inlined_call_operand.vmem [shape: f32[2,4,256], index: 3, kind: output, shape index: {}]
  %s4 = sld [smem:[#allocation0]]
  $region45: #{forward.9} parent=0
    _
  %s6 = ssub.s32 1, %s4
  %s7 = scalar_select 0, %s6, %s4
  loop: start=0, step=1, limit=4
  $region2: #{forward.9} parent=0 // loop_pre_header
    _
  $region3: #{forward.9} parent=0 // loop_header
    %s9 = sphi 0, %s13
    %p10 = scmp.ge.s32.totalorder %s9, 4
    %s16 = sphi 0, %s28
    %s17 = sphi 0, %s24
    %s18 = sphi 0, %s16
    %s19 = sphi 0, %s17
    %s20 = sphi 0, %s18
    %s21 = sphi 0, %s19
    %s33 = sphi 0, %s35
    %s36 = sphi 0, %s33
    %s37 = sphi 0, %s36
    %s53 = sphi 0, %s37
    %s57 = sphi 0, %s57
    %s59 = sphi 0, %s57
    %s60 = sphi 0, %s59
    %s74 = sphi 0, %s60
    %s78 = sphi 0, %s78
    %s80 = sphi 0, %s78
    %s81 = sphi 0, %s80
    %s95 = sphi 0, %s81
    %s103 = sphi 0, %s105
    %s106 = sphi 0, %s103
    %s107 = sphi 0, %s106
    %s123 = sphi 0, %s107
  $region4: #{forward.9} parent=0 // loop_header_branch
    %12 = sbr.rel (%p10) target = $region8
  $region5: #{forward.9} parent=0 // loop_body
    %s14 = ssub.s32 %s9, 1
    %s15 = ssub.s32 %s9, 2
    %s22 = sadd.s32 1, %s17
    %p23 = scmp.ge.s32.totalorder %s22, 1
    %s24 = scalar_select %p23, 0, %s22
    %s25 = sadd.s32 1, %s16
    %s26 = scalar_select %p23, %s25, %s16
    %p27 = scmp.ge.s32.totalorder %s26, 2
    %s28 = scalar_select %p27, 0, %s26
    %s29 = ssub.s32 %s16, %s28
    %s30 = ssub.s32 %s17, %s24
    %s31 = sor.u32 %s29, %s30
    %p32 = scmp.eq.s32.totalorder %s31, 0
    %s34 = sadd.s32 %s33, 1
    %s35 = scalar_select %p32, %s33, %s34
    %p38 = pneg %p32
    %p39 = scmp.eq.s32.totalorder %s9, 1
    %p40 = por %p38, %p39
    %p41 = scmp.ne.s32.totalorder %s33, %s36
    %p42 = scmp.eq.s32.totalorder %s9, 0
    %p43 = por %p41, %p42
    %p44 = scmp.ne.s32.totalorder %s33, %s36
    %p45 = scmp.eq.s32.totalorder %s14, 1
    %p46 = por %p44, %p45
    %p47 = scmp.ne.s32.totalorder %s36, %s37
    %p48 = scmp.eq.s32.totalorder %s14, 0
    %p49 = por %p47, %p48
    %p50 = scmp.ne.s32.totalorder %s36, %s37
    %p51 = scmp.eq.s32.totalorder %s15, 1
    %p52 = por %p50, %p51
    %p54 = scmp.ne.s32.totalorder %s37, %s53
    %p55 = scmp.eq.s32.totalorder %s15, 0
    %p56 = por %p54, %p55
    %s58 = sadd.s32 %s57, 1
    %p61 = scmp.eq.s32.totalorder %s9, 1
    %p62 = scmp.ne.s32.totalorder %s57, %s59
    %p63 = scmp.eq.s32.totalorder %s9, 0
    %p64 = por %p62, %p63
    %p65 = scmp.ne.s32.totalorder %s57, %s59
    %p66 = scmp.eq.s32.totalorder %s14, 1
    %p67 = por %p65, %p66
    %p68 = scmp.ne.s32.totalorder %s59, %s60
    %p69 = scmp.eq.s32.totalorder %s14, 0
    %p70 = por %p68, %p69
    %p71 = scmp.ne.s32.totalorder %s59, %s60
    %p72 = scmp.eq.s32.totalorder %s15, 1
    %p73 = por %p71, %p72
    %p75 = scmp.ne.s32.totalorder %s60, %s74
    %p76 = scmp.eq.s32.totalorder %s15, 0
    %p77 = por %p75, %p76
    %s79 = sadd.s32 %s78, 1
    %p82 = scmp.eq.s32.totalorder %s9, 1
    %p83 = scmp.ne.s32.totalorder %s78, %s80
    %p84 = scmp.eq.s32.totalorder %s9, 0
    %p85 = por %p83, %p84
    %p86 = scmp.ne.s32.totalorder %s78, %s80
    %p87 = scmp.eq.s32.totalorder %s14, 1
    %p88 = por %p86, %p87
    %p89 = scmp.ne.s32.totalorder %s80, %s81
    %p90 = scmp.eq.s32.totalorder %s14, 0
    %p91 = por %p89, %p90
    %p92 = scmp.ne.s32.totalorder %s80, %s81
    %p93 = scmp.eq.s32.totalorder %s15, 1
    %p94 = por %p92, %p93
    %p96 = scmp.ne.s32.totalorder %s81, %s95
    %p97 = scmp.eq.s32.totalorder %s15, 0
    %p98 = por %p96, %p97
    %s99 = ssub.s32 %s16, %s28
    %s100 = ssub.s32 %s17, %s24
    %s101 = sor.u32 %s99, %s100
    %p102 = scmp.eq.s32.totalorder %s101, 0
    %s104 = sadd.s32 %s103, 1
    %s105 = scalar_select %p102, %s103, %s104
    %p108 = pneg %p102
    %p109 = scmp.eq.s32.totalorder %s9, 1
    %p110 = por %p108, %p109
    %p111 = scmp.ne.s32.totalorder %s103, %s106
    %p112 = scmp.eq.s32.totalorder %s9, 0
    %p113 = por %p111, %p112
    %p114 = scmp.ne.s32.totalorder %s103, %s106
    %p115 = scmp.eq.s32.totalorder %s14, 1
    %p116 = por %p114, %p115
    %p117 = scmp.ne.s32.totalorder %s106, %s107
    %p118 = scmp.eq.s32.totalorder %s14, 0
    %p119 = por %p117, %p118
    %p120 = scmp.ne.s32.totalorder %s106, %s107
    %p121 = scmp.eq.s32.totalorder %s15, 1
    %p122 = por %p120, %p121
    %p124 = scmp.ne.s32.totalorder %s107, %s123
    %p125 = scmp.eq.s32.totalorder %s15, 0
    %p126 = por %p124, %p125
    %p127 = scmp.le.s32.totalorder 1, %s9
    %p128 = scmp.lt.s32.totalorder %s9, 3
    %p129 = pnand %p127, %p128
    %p130 = pneg %p129
    // Predicated region
    $region9: #{forward.9} parent=5 // pred_check
      _
    $region10: #{forward.9} parent=5 // pred_check_branch
      %132 = sbr.rel (%p129) target = $region12
    $region11: #{forward.9} parent=5 // pred_region
      %s133 = ssub.s32 %s9, 1
      // Predicated region
      $region13: #{forward.9} parent=11 // pred_check
        %p134 = pneg %p70
      $region14: #{forward.9} parent=11 // pred_check_branch
        %136 = sbr.rel (%p134) target = $region16
      $region15: #{forward.9} parent=11 // pred_region
        _
      $region16: #{forward.9} parent=11 // pred_fallthru
        _
      // Predicated region
      $region17: #{forward.9} parent=11 // pred_check
        %p137 = pneg %p91
      $region18: #{forward.9} parent=11 // pred_check_branch
        %139 = sbr.rel (%p137) target = $region20
      $region19: #{forward.9} parent=11 // pred_region
        _
      $region20: #{forward.9} parent=11 // pred_fallthru
        _
    $region12: #{forward.9} parent=5 // pred_fallthru
      _
    %p140 = scmp.lt.s32.totalorder %s9, 2
    // Predicated region
    $region21: #{forward.9} parent=5 // pred_check
      %p141 = pneg %p140
    $region22: #{forward.9} parent=5 // pred_check_branch
      %143 = sbr.rel (%p141) target = $region24
    $region23: #{forward.9} parent=5 // pred_region
      // Predicated region
      $region25: #{forward.9} parent=23 // pred_check
        %p144 = pneg %p43
      $region26: #{forward.9} parent=23 // pred_check_branch
        %146 = sbr.rel (%p144) target = $region28
      $region27: #{forward.9} parent=23 // pred_region
        %s147 = smul.u32 2, %s17
        %p148 = scmp.lt.s32.totalorder %s16, 1
        %s149 = scalar_select %p148, %s16, 1
        %p150 = scmp.lt.s32.totalorder %s147, 1
        %s151 = scalar_select %p150, %s147, 1
        %s152 = smul.addr %s149, 2
        %s153 = sadd.s32 %s151, %s152
        %s154 = smul.addr %s153, 4
        %s155 = scalar_lea.vmem %s0, %s154
        %s156 = smul.u32 2, %s17
      $region28: #{forward.9} parent=23 // pred_fallthru
        _
    $region24: #{forward.9} parent=5 // pred_fallthru
      _
    %p157 = scmp.le.s32.totalorder 1, %s9
    %p158 = scmp.lt.s32.totalorder %s9, 3
    %p159 = pnand %p157, %p158
    %p160 = pneg %p159
    // Predicated region
    $region29: #{forward.9} parent=5 // pred_check
      _
    $region30: #{forward.9} parent=5 // pred_check_branch
      %162 = sbr.rel (%p159) target = $region32
    $region31: #{forward.9} parent=5 // pred_region
      %s163 = ssub.s32 %s9, 1
      %s164 = smul.u32 2, %s19
      %p165 = scmp.lt.s32.totalorder %s18, 1
      %s166 = scalar_select %p165, %s18, 1
      %p167 = scmp.lt.s32.totalorder %s164, 1
      %s168 = scalar_select %p167, %s164, 1
      %s169 = smul.addr %s166, 2
      %s170 = sadd.s32 %s168, %s169
      %s171 = smul.addr %s170, 4
      %s172 = scalar_lea.vmem %s0, %s171
      %p173 = pneg %p49
      %p174 = pneg %p46
      %p175 = pneg %p70
      %p176 = pneg %p67
      %p177 = pneg %p91
      %p178 = pneg %p88
      %p179 = pneg %p119
      %p180 = pneg %p116
      %s181 = smul.u32 2, %s19
      %p182 = scmp.lt.s32.totalorder %s18, 1
      %s183 = scalar_select %p182, %s18, 1
      %p184 = scmp.lt.s32.totalorder %s181, 1
      %s185 = scalar_select %p184, %s181, 1
      %s186 = smul.addr %s183, 2
      %s187 = sadd.s32 %s185, %s186
      %s188 = smul.addr %s187, 4
      %s189 = scalar_lea.vmem %s3, %s188
      %s190 = smul.u32 2, %s19
      %p191 = scmp.lt.s32.totalorder %s18, 1
      %s192 = scalar_select %p191, %s18, 1
      %p193 = scmp.lt.s32.totalorder %s190, 1
      %s194 = scalar_select %p193, %s190, 1
      %s195 = smul.addr %s192, 2
      %s196 = sadd.s32 %s194, %s195
      %s197 = smul.addr %s196, 4
      %s198 = scalar_lea.vmem %s0, %s197
      %s199 = smul.u32 2, %s19
      %s200 = smul.u32 2, %s19
      %p201 = scmp.lt.s32.totalorder %s18, 1
      %s202 = scalar_select %p201, %s18, 1
      %p203 = scmp.lt.s32.totalorder %s200, 1
      %s204 = scalar_select %p203, %s200, 1
      %s205 = smul.addr %s202, 2
      %s206 = sadd.s32 %s204, %s205
      %s207 = smul.addr %s206, 4
      %s208 = scalar_lea.vmem %s3, %s207
      %s209 = smul.u32 2, %s19
      %v210 = vld [vmem:[%s198] sm:$0xff]
      %v211 = vld [vmem:[%s1] sm:$0xf]
      %v212 = vld [vmem:[%s2] sm:$0xf]
      %214 = vset.pattern.permute.xlu0 0
      %215 = vperm.xlu0 %214, %v211
      %v216 = vpop.permute.xlu0 %215
      %v219 = vperm.slane %v210, 0
      %v220 = vperm.slane %v210, 4
      %v223 = vperm.slane %v219, 0
      %v224 = vperm.slane %v220, 0
      %v225 = vmul.f32 %v216, %v223
      %v226 = vmul.f32 %v216, %v224
      %v227 = vadd.f32 %v225, 0.0
      %v228 = vadd.f32 %v226, 0.0
      %229 = vset.pattern.permute.xlu0 1
      %230 = vperm.xlu0 %229, %v211
      %v231 = vpop.permute.xlu0 %230
      %v233 = vperm.slane %v210, 1
      %v234 = vperm.slane %v210, 5
      %v237 = vperm.slane %v233, 1
      %v238 = vperm.slane %v234, 1
      %v239 = vmul.f32 %v231, %v237
      %v240 = vmul.f32 %v231, %v238
      %v241 = vadd.f32 %v227, %v239
      %v242 = vadd.f32 %v228, %v240
      %243 = vset.pattern.permute.xlu0 2
      %244 = vperm.xlu0 %243, %v211
      %v245 = vpop.permute.xlu0 %244
      %v247 = vperm.slane %v210, 2
      %v248 = vperm.slane %v210, 6
      %v251 = vperm.slane %v247, 2
      %v252 = vperm.slane %v248, 2
      %v253 = vmul.f32 %v245, %v251
      %v254 = vmul.f32 %v245, %v252
      %v255 = vadd.f32 %v241, %v253
      %v256 = vadd.f32 %v242, %v254
      %257 = vset.pattern.permute.xlu0 3
      %258 = vperm.xlu0 %257, %v211
      %v259 = vpop.permute.xlu0 %258
      %v261 = vperm.slane %v210, 3
      %v262 = vperm.slane %v210, 7
      %v265 = vperm.slane %v261, 3
      %v266 = vperm.slane %v262, 3
      %v267 = vmul.f32 %v259, %v265
      %v268 = vmul.f32 %v259, %v266
      %v269 = vadd.f32 %v255, %v267
      %v270 = vadd.f32 %v256, %v268
      %272 = vset.pattern.permute.xlu0 0
      %273 = vperm.xlu0 %272, %v212
      %v274 = vpop.permute.xlu0 %273
      %v276 = vadd.f32 %v269, %v274
      %v277 = vadd.f32 %v270, %v274
      %v280 = vrot.slane %v277, 4
      %vm281 = vcmask 1043456
      %v282 = vsel %vm281, %v276, %v280
      %284 = vst [vmem:[%s208] sm:$0xff] %v282
      %s285 = smul.u32 2, %s19
      %p286 = scmp.lt.s32.totalorder %s18, 1
      %s287 = scalar_select %p286, %s18, 1
      %p288 = scmp.lt.s32.totalorder %s285, 1
      %s289 = scalar_select %p288, %s285, 1
      %s290 = smul.addr %s287, 2
      %s291 = sadd.s32 %s289, %s290
      %s292 = smul.addr %s291, 4
      %s293 = scalar_lea.vmem %s3, %s292
      // Predicated region
      $region33: #{forward.9} parent=31 // pred_check
        %p294 = pneg %p116
      $region34: #{forward.9} parent=31 // pred_check_branch
        %296 = sbr.rel (%p294) target = $region36
      $region35: #{forward.9} parent=31 // pred_region
        %s297 = smul.u32 2, %s19
      $region36: #{forward.9} parent=31 // pred_fallthru
        _
    $region32: #{forward.9} parent=5 // pred_fallthru
      _
    %p298 = scmp.le.s32.totalorder 2, %s9
    // Predicated region
    $region37: #{forward.9} parent=5 // pred_check
      %p299 = pneg %p298
    $region38: #{forward.9} parent=5 // pred_check_branch
      %301 = sbr.rel (%p299) target = $region40
    $region39: #{forward.9} parent=5 // pred_region
      %s302 = ssub.s32 %s9, 2
      // Predicated region
      $region41: #{forward.9} parent=39 // pred_check
        %p303 = pneg %p122
      $region42: #{forward.9} parent=39 // pred_check_branch
        %305 = sbr.rel (%p303) target = $region44
      $region43: #{forward.9} parent=39 // pred_region
        %s306 = smul.u32 2, %s21
        %p307 = scmp.lt.s32.totalorder %s20, 1
        %s308 = scalar_select %p307, %s20, 1
        %p309 = scmp.lt.s32.totalorder %s306, 1
        %s310 = scalar_select %p309, %s306, 1
        %s311 = smul.addr %s308, 2
        %s312 = sadd.s32 %s310, %s311
        %s313 = smul.addr %s312, 4
        %s314 = scalar_lea.vmem %s3, %s313
      $region44: #{forward.9} parent=39 // pred_fallthru
        _
    $region40: #{forward.9} parent=5 // pred_fallthru
      _
  $region6: #{forward.9} parent=0 // loop_footer
    %s13 = sadd.s32 1, %s9
  $region7: #{forward.9} parent=0 // loop_footer_branch
    %8 = sbr.rel target = $region3
  $region8: #{forward.9} parent=0 // loop_exit
    _

</llo_original>
